<compile_context>
chip_gen: v6e
topology: v6e:2x2x1
jax: 0.10.0
libtpu: 0.0.40
codegen_flags: <defaults>
</compile_context>

<pallas_src>
import functools

import jax
import jax.numpy as jnp
from jax.experimental import pallas as pl
from jax.experimental.pallas import tpu as pltpu


def _kl_loss_kernel(total_batch, pred_ref, label_ref, out_ref):
    i = pl.program_id(0)
    tb, c = pred_ref.shape

    # Cast on load (inputs may be bf16).  The cast is VALU work in the body, but the
    # kernel is HBM-bound (f32) / EUP-bound (bf16), so it is not the binding slot.
    pred = pred_ref[...].astype(jnp.float32)
    lab = label_ref[...].astype(jnp.float32) * 10.0

    def row_sum(x):
        # Plain VALU-tree + XLU-finish lane reduce; MXU routing removed per review.
        return jnp.sum(x, axis=1, keepdims=True)

    # log_softmax(prediction) pieces.
    z1 = pred - jnp.max(pred, axis=1, keepdims=True)
    s1 = row_sum(jnp.exp(z1))                       # (tb, 1)

    # softmax(10 * label) pieces.
    z2 = lab - jnp.max(lab, axis=1, keepdims=True)
    e2 = jnp.exp(z2)
    s2 = row_sum(e2)                                # (tb, 1), always >= 1

    # Fused per-row KL:
    #   sum_c p2 * (log p2 - log p1) = (1/s2) * sum_c e2*(z2 - z1) + log(s1/s2)
    num = row_sum(e2 * (z2 - z1))                   # (tb, 1)
    inv_s2 = pl.reciprocal(s2, approx=True)         # EUP slot
    inv_s2 = inv_s2 * (2.0 - s2 * inv_s2)           # one Newton step -> ~f32-exact (per-row only)
    contrib = num * inv_s2 + jnp.log(s1 * inv_s2)   # single log per row

    # Mask rows past the true batch size.  This elementwise select is what makes any
    # inf/NaN in garbage tail rows harmless -- it must stay BEFORE any reduction.
    row = i * tb + jax.lax.broadcasted_iota(jnp.int32, (tb, 1), 0)
    out_ref[...] = jnp.where(row < total_batch, contrib, 0.0)


def _vmem_budget_and_limit():
    """Generation-aware (scoped-VMEM budget, vmem_limit_bytes) pair."""
    try:
        phys = int(pltpu.get_tpu_info().vmem_capacity_bytes)
    except Exception:  # pragma: no cover - defensive fallback on exotic targets
        phys = 64 * 1024 * 1024
    if phys >= 128 * 1024 * 1024:
        # v5e / v6e: 128 MiB physical per TensorCore -> use a large scoped window.
        limit = 96 * 1024 * 1024
    else:
        # v7x: only 64 MiB physical per TensorCore -> stay well inside it.
        limit = 48 * 1024 * 1024
    budget = limit - 8 * 1024 * 1024                # headroom for Mosaic internals
    return budget, limit


def _choose_block_rows(batch, classes, in_itemsize, budget_bytes):
    """Pick TB (rows per grid step) and the input buffer depth from the VMEM budget."""
    b_pad = ((batch + 7) // 8) * 8

    def fit(num_bufs):
        # Per row of a tile:
        #   pipeline buffers: 2 inputs x num_bufs x C x itemsize
        #   live temps:       ~4 simultaneously-live full-tile f32 arrays
        #   output:           negligible (keepdims=1 column)
        per_row = 2 * num_bufs * classes * in_itemsize + 4 * classes * 4 + 16
        t = budget_bytes // max(per_row, 1)
        t = min(t, b_pad)                            # no point exceeding padded batch
        return max(8, (t // 8) * 8)                  # sublane multiple of 8

    tb = fit(2)
    buffers = 2
    # Very wide C forces tiny row tiles; only then deepen input buffering to hide
    # DMA issue latency (and re-fit TB accounting for the third buffer).
    if tb <= 64 and b_pad > 4 * tb:
        buffers = 3
        tb = fit(3)
    return int(tb), buffers


def kl_loss(prediction, label, *, block_rows=None):
    """Pallas equivalent of KLLoss().forward(prediction, label). Returns a scalar."""
    assert prediction.shape == label.shape and prediction.ndim == 2
    B, C = prediction.shape

    pred_bytes = jnp.dtype(prediction.dtype).itemsize
    lab_bytes = jnp.dtype(label.dtype).itemsize

    budget_bytes, vmem_limit = _vmem_budget_and_limit()
    if block_rows is None:
        tb, buffers = _choose_block_rows(B, C, max(pred_bytes, lab_bytes), budget_bytes)
    else:
        tb, buffers = int(block_rows), 2
    assert tb % 8 == 0, "block_rows must be a multiple of 8"
    nb = pl.cdiv(B, tb)
    b_pad = nb * tb

    cost = pl.CostEstimate(
        flops=12 * B * C,
        transcendentals=2 * B * C + 3 * B,           # 2 exps / element; 1 log + recip / row
        bytes_accessed=B * C * (pred_bytes + lab_bytes) + b_pad * 4,
    )

    if buffers == 2:
        in_specs = [
            pl.BlockSpec((tb, C), lambda i: (i, 0)),
            pl.BlockSpec((tb, C), lambda i: (i, 0)),
        ]
    else:
        in_specs = [
            pl.BlockSpec((tb, C), lambda i: (i, 0), pipeline_mode=pl.Buffered(buffers)),
            pl.BlockSpec((tb, C), lambda i: (i, 0), pipeline_mode=pl.Buffered(buffers)),
        ]

    partial = pl.pallas_call(
        functools.partial(_kl_loss_kernel, B),
        out_shape=jax.ShapeDtypeStruct((b_pad, 1), jnp.float32),
        grid=(nb,),
        in_specs=in_specs,
        out_specs=pl.BlockSpec((tb, 1), lambda i: (i, 0)),
        compiler_params=pltpu.CompilerParams(
            # Independent blocks; on v7x this should shard the batch grid across both
            # TensorCores (verify in xprof; see TODO at top of file).
            dimension_semantics=("parallel",),
            vmem_limit_bytes=vmem_limit,
        ),
        cost_estimate=cost,
    )(prediction, label)

    # reduction='batchmean': sum over all elements / true batch size (done once, in XLA).
    return jnp.sum(partial) / jnp.float32(B)


def _kl_loss_ref(prediction, label):
    """Pure-JAX reference for correctness checking."""
    p = prediction.astype(jnp.float32)
    l = label.astype(jnp.float32) * 10.0
    log_p1 = jax.nn.log_softmax(p, axis=1)
    p2 = jax.nn.softmax(l, axis=1)
    log_p2 = jax.nn.log_softmax(l, axis=1)
    pointwise = p2 * (log_p2 - log_p1)
    return jnp.sum(pointwise) / prediction.shape[0]


if __name__ == "__main__":
    root = jax.random.PRNGKey(0)

    def check(B, C, dtype, block_rows=None):
        k1, k2 = jax.random.split(jax.random.fold_in(root, B * 1000 + C))
        prediction = jax.random.normal(k1, (B, C), dtype=jnp.float32).astype(dtype)
        label = jax.random.normal(k2, (B, C), dtype=jnp.float32).astype(dtype)
        loss = kl_loss(prediction, label, block_rows=block_rows)
        jax.block_until_ready(loss)
        ref = _kl_loss_ref(prediction, label)
        assert jnp.allclose(loss, ref, rtol=1e-4, atol=1e-5), (B, C, dtype, loss, ref)

    check(8, 32, jnp.float32)                     # small shape consistent with the module
    check(20, 128, jnp.float32, block_rows=8)     # multi-block grid + tail-row masking
    check(16, 128, jnp.bfloat16)                  # bf16 inputs, cast on load inside the kernel

    print("KERNEL_OK")
</pallas_src>

<mosaic_0001>
module attributes {stable_mosaic.version = 11 : i64} {
  func.func @_kl_loss_kernel(%arg0: i32, %arg1: memref<8x32xf32, #tpu.memory_space<vmem>>, %arg2: memref<8x32xf32, #tpu.memory_space<vmem>>, %arg3: memref<8x1xf32, #tpu.memory_space<vmem>>) attributes {dimension_semantics = [#tpu.dimension_semantics<parallel>], iteration_bounds = array<i64: 1>, scalar_prefetch = 0 : i64, scratch_operands = 0 : i64, tpu.core_type = #tpu.core_type<tc>, window_params = [{transform_indices = @transform_0, window_bounds = array<i64: 8, 32>}, {transform_indices = @transform_1, window_bounds = array<i64: 8, 32>}, {transform_indices = @transform_2, window_bounds = array<i64: 8, 1>}]} {
    %c0 = arith.constant 0 : index
    %c0_0 = arith.constant 0 : index
    %0 = vector.load %arg1[%c0, %c0_0] : memref<8x32xf32, #tpu.memory_space<vmem>>, vector<8x32xf32>
    %c0_1 = arith.constant 0 : index
    %c0_2 = arith.constant 0 : index
    %1 = vector.load %arg2[%c0_1, %c0_2] : memref<8x32xf32, #tpu.memory_space<vmem>>, vector<8x32xf32>
    %cst = arith.constant 1.000000e+01 : f32
    %2 = vector.broadcast %cst : f32 to vector<8x32xf32>
    %3 = arith.mulf %1, %2 : vector<8x32xf32>
    %cst_3 = arith.constant dense<0xFF800000> : vector<8xf32>
    %4 = vector.multi_reduction <maximumf>, %0, %cst_3 [1] : vector<8x32xf32> to vector<8xf32>
    %5 = vector.shape_cast %4 : vector<8xf32> to vector<8x1xf32>
    %6 = vector.broadcast %5 : vector<8x1xf32> to vector<8x32xf32>
    %7 = arith.subf %0, %6 : vector<8x32xf32>
    %8 = math.exp %7 : vector<8x32xf32>
    %cst_4 = arith.constant dense<0.000000e+00> : vector<8xf32>
    %9 = vector.multi_reduction <add>, %8, %cst_4 [1] : vector<8x32xf32> to vector<8xf32>
    %10 = vector.shape_cast %9 : vector<8xf32> to vector<8x1xf32>
    %cst_5 = arith.constant dense<0xFF800000> : vector<8xf32>
    %11 = vector.multi_reduction <maximumf>, %3, %cst_5 [1] : vector<8x32xf32> to vector<8xf32>
    %12 = vector.shape_cast %11 : vector<8xf32> to vector<8x1xf32>
    %13 = vector.broadcast %12 : vector<8x1xf32> to vector<8x32xf32>
    %14 = arith.subf %3, %13 : vector<8x32xf32>
    %15 = math.exp %14 : vector<8x32xf32>
    %cst_6 = arith.constant dense<0.000000e+00> : vector<8xf32>
    %16 = vector.multi_reduction <add>, %15, %cst_6 [1] : vector<8x32xf32> to vector<8xf32>
    %17 = vector.shape_cast %16 : vector<8xf32> to vector<8x1xf32>
    %18 = arith.subf %14, %7 : vector<8x32xf32>
    %19 = arith.mulf %15, %18 : vector<8x32xf32>
    %cst_7 = arith.constant dense<0.000000e+00> : vector<8xf32>
    %20 = vector.multi_reduction <add>, %19, %cst_7 [1] : vector<8x32xf32> to vector<8xf32>
    %21 = vector.shape_cast %20 : vector<8xf32> to vector<8x1xf32>
    %22 = tpu.reciprocal %17 {approx = true} : vector<8x1xf32> -> vector<8x1xf32>
    %23 = arith.mulf %17, %22 : vector<8x1xf32>
    %cst_8 = arith.constant 2.000000e+00 : f32
    %24 = vector.broadcast %cst_8 : f32 to vector<8x1xf32>
    %25 = arith.subf %24, %23 : vector<8x1xf32>
    %26 = arith.mulf %22, %25 : vector<8x1xf32>
    %27 = arith.mulf %21, %26 : vector<8x1xf32>
    %28 = arith.mulf %10, %26 : vector<8x1xf32>
    %29 = math.log %28 : vector<8x1xf32>
    %30 = arith.addf %27, %29 : vector<8x1xf32>
    %c8_i32 = arith.constant 8 : i32
    %31 = arith.muli %arg0, %c8_i32 : i32
    %32 = tpu.iota {dimensions = array<i32: 0>} : vector<8x1xi32>
    %33 = vector.broadcast %31 : i32 to vector<8x1xi32>
    %34 = arith.addi %33, %32 : vector<8x1xi32>
    %c8_i32_9 = arith.constant 8 : i32
    %35 = vector.broadcast %c8_i32_9 : i32 to vector<8x1xi32>
    %36 = arith.cmpi slt, %34, %35 : vector<8x1xi32>
    %cst_10 = arith.constant 0.000000e+00 : f32
    %37 = vector.broadcast %cst_10 : f32 to vector<8x1xf32>
    %38 = arith.select %36, %30, %37 : vector<8x1xi1>, vector<8x1xf32>
    %c0_11 = arith.constant 0 : index
    %c0_12 = arith.constant 0 : index
    %39 = vector.load %arg3[%c0_11, %c0_12] : memref<8x1xf32, #tpu.memory_space<vmem>>, vector<8x1xf32>
    tpu.vector_store %arg3[%c0_11, %c0_12], %38 {strides = array<i32>} : memref<8x1xf32, #tpu.memory_space<vmem>>, vector<8x1xf32>,
    return
  }
  func.func @transform_0(%arg0: i32) -> (i32, i32) {
    %c0_i32 = arith.constant 0 : i32
    %c0_i32_0 = arith.constant 0 : i32
    return %arg0, %c0_i32 : i32, i32
  }
  func.func @transform_1(%arg0: i32) -> (i32, i32) {
    %c0_i32 = arith.constant 0 : i32
    %c0_i32_0 = arith.constant 0 : i32
    return %arg0, %c0_i32 : i32, i32
  }
  func.func @transform_2(%arg0: i32) -> (i32, i32) {
    %c0_i32 = arith.constant 0 : i32
    %c0_i32_0 = arith.constant 0 : i32
    return %arg0, %c0_i32 : i32, i32
  }
}

</mosaic_0001>

<llo_original>
// kernel: tpu_custom_call.1
$region0: #{tpu_custom_call.1}
  #allocation0 [shape = 'u32[]', space=smem, size = 0x4, offset = 0x4, fixed_abs, tag = 'smem constant byte address 0x4 - core index']
  #allocation1 [shape = 'u32[144,128]{1,0:T(1,128)}', space=vmem, size = 0x12000, scoped, tag = 'internal scratch']
  %s0 = inlined_call_operand.hbm [shape: f32[8,32], index: 0, kind: input, shape index: {}]
  %s1 = inlined_call_operand.hbm [shape: f32[8,32], index: 1, kind: input, shape index: {}]
  %s2 = inlined_call_operand.vmem [shape: f32[8,1], index: 2, kind: output, shape index: {}]
  %s3 = sld [smem:[#allocation0]]
  $region26: #{tpu_custom_call.1} parent=0
    _
  %s5 = ssub.s32 1, %s3
  %s6 = scalar_select 0, %s5, %s3
  $region1: #{tpu_custom_call.1} parent=0
    #allocation2 [shape = 'u8[4096]{0}', space=vmem, size = 0x1000, scoped, tag = 'input window, operand 0, single buffered']
    #allocation3 [shape = 's32[1]{0}', space=sflag, size = 0x4, scoped, tag = 'scoped memory for tpu_custom_call.1']
    #allocation4 [shape = 'u8[4096]{0}', space=vmem, size = 0x1000, scoped, tag = 'input window, operand 1, single buffered']
    #allocation5 [shape = 's32[1]{0}', space=sflag, size = 0x4, scoped, tag = 'scoped memory for tpu_custom_call.1']
    %7 = vsyncpa [#allocation3], 0
    %8 = vsyncpa [#allocation5], 0
    // Predicated region
    $region2: #{tpu_custom_call.1} parent=1 // pred_check
      _
    $region3: #{tpu_custom_call.1} parent=1 // pred_check_branch
      %10 = sbr.rel (0) target = $region5
    $region4: #{tpu_custom_call.1} parent=1 // pred_region
      %s12 = ssub.s32 128, 128
      %13 = vsyncadd [#allocation3], %s12
      %s15 = sshll.u32 [#allocation2], 4
      %s16 = int_to_ptr.vmem [resolvable:$true] %s15
      %18 = dma.hbm_to_vmem [thread:$0]  %s0, 128, %s16, [#allocation3]
    $region5: #{tpu_custom_call.1} parent=1 // pred_fallthru
      _
    // Predicated region
    $region6: #{tpu_custom_call.1} parent=1 // pred_check
      _
    $region7: #{tpu_custom_call.1} parent=1 // pred_check_branch
      %20 = sbr.rel (0) target = $region9
    $region8: #{tpu_custom_call.1} parent=1 // pred_region
      %s22 = ssub.s32 128, 128
      %23 = vsyncadd [#allocation5], %s22
      %s25 = sshll.u32 [#allocation4], 4
      %s26 = int_to_ptr.vmem [resolvable:$true] %s25
      %28 = dma.hbm_to_vmem [thread:$0]  %s1, 128, %s26, [#allocation5]
    $region9: #{tpu_custom_call.1} parent=1 // pred_fallthru
      _
    // Predicated region
    $region10: #{tpu_custom_call.1} parent=1 // pred_check
      _
    $region11: #{tpu_custom_call.1} parent=1 // pred_check_branch
      %30 = sbr.rel (0) target = $region13
    $region12: #{tpu_custom_call.1} parent=1 // pred_region
      %31 = dma.done [#allocation3], 128
    $region13: #{tpu_custom_call.1} parent=1 // pred_fallthru
      _
    // Predicated region
    $region14: #{tpu_custom_call.1} parent=1 // pred_check
      _
    $region15: #{tpu_custom_call.1} parent=1 // pred_check_branch
      %33 = sbr.rel (0) target = $region17
    $region16: #{tpu_custom_call.1} parent=1 // pred_region
      %34 = dma.done [#allocation5], 128
    $region17: #{tpu_custom_call.1} parent=1 // pred_fallthru
      _
    %v35 = vld [vmem:[#allocation2] sm:$0xff]
    %v36 = vld [vmem:[#allocation4] sm:$0xff]
    %v37 = vmul.f32 %v36, 10.0
    %vm38 = vcmask 261120
    %v39 = vsel %vm38, %v35, -inf
    %40 = vmax.xlane.f32.xlu0 %v39
    %v41 = vpop.xlane.xlu0 %40
    %v42 = vsub.f32 %v35, %v41
    %v43 = vmul.f32 %v42, 1.442695
    %v44 = vpow.pop %v43
    %v45 = vsel %vm38, %v44, 0.0
    %46 = vadd.xlane.f32.xlu0 %v45
    %v47 = vpop.xlane.xlu0 %46
    %v48 = vsel %vm38, %v37, -inf
    %49 = vmax.xlane.f32.xlu0 %v48
    %v50 = vpop.xlane.xlu0 %49
    %v51 = vsub.f32 %v37, %v50
    %v52 = vmul.f32 %v51, 1.442695
    %v53 = vpow.pop %v52
    %v54 = vsel %vm38, %v53, 0.0
    %55 = vadd.xlane.f32.xlu0 %v54
    %v56 = vpop.xlane.xlu0 %55
    %v57 = vsub.f32 %v51, %v42
    %v58 = vmul.f32 %v53, %v57
    %v59 = vsel %vm38, %v58, 0.0
    %60 = vadd.xlane.f32.xlu0 %v59
    %v61 = vpop.xlane.xlu0 %60
    %v62 = vrcp.pop %v56
    %v63 = vmul.f32 %v56, %v62
    %v64 = vsub.f32 2.0, %v63
    %v65 = vmul.f32 %v62, %v64
    %v66 = vmul.f32 %v61, %v65
    %v67 = vmul.f32 %v47, %v65
    %v68 = vlog2.pop %v67
    %v69 = vmul.f32 %v68, 0.6931472
    %v70 = vadd.f32 %v66, %v69
    %s71 = smul.u32 0, 8
    %v72 = vlaneseq
    %v73 = vshrl.u32 %v72, 7
    %v74 = vstv %s71
    %v75 = vadd.s32 %v74, %v73
    %vm76 = vcmp.lt.s32.totalorder %v75, 8
    %v77 = vsel %vm76, %v70, 0.0
    %vm78 = vcmask 7168
    %79 = vst.msk [vmem:[%s2] sm:$0xff] %vm78, %v77
    // Predicated region
    $region18: #{tpu_custom_call.1} parent=1 // pred_check
      _
    $region19: #{tpu_custom_call.1} parent=1 // pred_check_branch
      %81 = sbr.rel (0) target = $region21
    $region20: #{tpu_custom_call.1} parent=1 // pred_region
      _
    $region21: #{tpu_custom_call.1} parent=1 // pred_fallthru
      _
    // Predicated region
    $region22: #{tpu_custom_call.1} parent=1 // pred_check
      _
    $region23: #{tpu_custom_call.1} parent=1 // pred_check_branch
      %83 = sbr.rel (0) target = $region25
    $region24: #{tpu_custom_call.1} parent=1 // pred_region
      _
    $region25: #{tpu_custom_call.1} parent=1 // pred_fallthru
      _
    %84 = vsyncpa [#allocation3], 1
    %85 = vsyncpa [#allocation5], 1

</llo_original>
